<compile_context>
chip_gen: v7x
topology: tpu7x:2x2x1
jax: 0.10.0
libtpu: 0.0.40
codegen_flags: <defaults>
</compile_context>

<pallas_src>
import functools
import math

import jax
import jax.numpy as jnp
from jax.experimental import pallas as pl
from jax.experimental.pallas import tpu as pltpu


def _round_up(x, m):
    return ((x + m - 1) // m) * m


def _mlp_block_kernel(x_ref, w_ref, b_ref, g_ref, beta_ref, o_ref, acc_ref,
                      *, activation, eps):
    """Fused Linear -> LayerNorm -> Activation for one (tile_b, D_out) tile."""
    k = pl.program_id(1)

    @pl.when(k == 0)
    def _():
        acc_ref[...] = jnp.zeros_like(acc_ref)

    # MXU matmul, f32 accumulation into VMEM scratch.
    acc_ref[...] += jnp.dot(x_ref[...], w_ref[...],
                            preferred_element_type=jnp.float32)

    @pl.when(k == pl.num_programs(1) - 1)
    def _():
        h = acc_ref[...] + b_ref[...].astype(jnp.float32)       # (tile_b, D_out)
        f = h.shape[-1]
        inv_f = 1.0 / f

        # One-pass statistics: both reductions are independent (XLU can overlap
        # with VPU work), var = E[x^2] - mean^2 in f32.
        s1 = jnp.sum(h, axis=-1, keepdims=True)
        s2 = jnp.sum(h * h, axis=-1, keepdims=True)
        mean = s1 * inv_f
        var = jnp.maximum(s2 * inv_f - mean * mean, 0.0)
        inv_std = jax.lax.rsqrt(var + eps)

        y = (h - mean) * inv_std
        y = y * g_ref[...].astype(jnp.float32) + beta_ref[...].astype(jnp.float32)

        if activation == "relu":
            y = jnp.maximum(y, 0.0)
        elif activation == "gelu":
            y = jax.nn.gelu(y)
        elif activation == "tanh":
            y = jnp.tanh(y)
        elif activation == "sigmoid":
            y = jax.nn.sigmoid(y)
        # else: identity

        # Eval-mode dropout == identity.
        o_ref[...] = y.astype(o_ref.dtype)


def _pick_tile_b(B, tile_k, d_out, itemsize):
    """Largest batch tile that fits a conservative VMEM budget (v5e-safe)."""
    # per-row VMEM bytes: double-buffered x tile + double-buffered out tile
    # + resident f32 accumulator row.
    per_row = 2 * tile_k * itemsize + 2 * d_out * itemsize + 4 * d_out
    budget = 8 << 20  # 8 MiB -> well under the 16 MiB scoped default on v5e
    sub = 16 if itemsize == 2 else 8  # bf16 packs 16 sublanes per vreg
    tb = budget // max(per_row, 1)
    tb = max(sub, min(1024, (tb // sub) * sub))
    # Keep >= 2 batch grid steps when the batch allows it (megacore on v7x,
    # DMA/compute overlap everywhere).
    b_pad = _round_up(B, sub)
    if b_pad >= 2 * sub:
        tb = min(tb, max(sub, (b_pad // 2 // sub) * sub))
    else:
        tb = min(tb, b_pad)
    return tb


def mlp_block(x, w1, b1, gamma, beta, *, activation="relu",
              tile_b=None, tile_k=None, eps=1e-5):
    """y = Act(LayerNorm(x @ w1 + b1)) with eval-mode dropout (identity).

    x:     (B, D_in)
    w1:    (D_in, D_out)   (PyTorch nn.Linear.weight.T)
    b1:    (D_out,)
    gamma: (D_out,)        LayerNorm weight
    beta:  (D_out,)        LayerNorm bias
    """
    B, D_in = x.shape
    d_in_w, D_out = w1.shape
    assert d_in_w == D_in and b1.shape == (D_out,)
    assert gamma.shape == (D_out,) and beta.shape == (D_out,)

    # Reduction tile over the input features.
    if tile_k is None:
        tile_k = D_in if D_in <= 512 else 512  # 512 is a multiple of 128 (lane-aligned)
    D_in_p = _round_up(D_in, tile_k)

    if tile_b is None:
        tile_b = _pick_tile_b(B, tile_k, D_out, x.dtype.itemsize)
    B_p = _round_up(B, tile_b)

    # Zero-pad batch / reduction dims if needed (sliced off / no-op in matmul).
    if B_p != B or D_in_p != D_in:
        x = jnp.pad(x, ((0, B_p - B), (0, D_in_p - D_in)))
    if D_in_p != D_in:
        w1 = jnp.pad(w1, ((0, D_in_p - D_in), (0, 0)))

    b1_2 = b1.reshape(1, D_out)
    g2 = gamma.reshape(1, D_out)
    beta2 = beta.reshape(1, D_out)

    grid = (B_p // tile_b, D_in_p // tile_k)
    kernel = functools.partial(_mlp_block_kernel, activation=activation, eps=eps)

    out = pl.pallas_call(
        kernel,
        out_shape=jax.ShapeDtypeStruct((B_p, D_out), x.dtype),
        grid_spec=pltpu.PrefetchScalarGridSpec(
            num_scalar_prefetch=0,
            grid=grid,
            in_specs=[
                pl.BlockSpec((tile_b, tile_k), lambda i, k: (i, k)),   # x tile
                pl.BlockSpec((tile_k, D_out), lambda i, k: (k, 0)),    # W tile
                pl.BlockSpec((1, D_out), lambda i, k: (0, 0)),         # bias
                pl.BlockSpec((1, D_out), lambda i, k: (0, 0)),         # gamma
                pl.BlockSpec((1, D_out), lambda i, k: (0, 0)),         # beta
            ],
            out_specs=pl.BlockSpec((tile_b, D_out), lambda i, k: (i, 0)),
            scratch_shapes=[pltpu.VMEM((tile_b, D_out), jnp.float32)],
        ),
        compiler_params=pltpu.CompilerParams(
            dimension_semantics=("parallel", "arbitrary"),
        ),
    )(x, w1, b1_2, g2, beta2)

    return out[:B]


def _reference_mlp_block(x, w1, b1, gamma, beta, activation="relu", eps=1e-5):
    h = x.astype(jnp.float32) @ w1.astype(jnp.float32) + b1.astype(jnp.float32)
    mean = jnp.mean(h, axis=-1, keepdims=True)
    var = jnp.mean((h - mean) ** 2, axis=-1, keepdims=True)
    y = (h - mean) / jnp.sqrt(var + eps) * gamma + beta
    if activation == "relu":
        y = jnp.maximum(y, 0.0)
    elif activation == "gelu":
        y = jax.nn.gelu(y)
    elif activation == "tanh":
        y = jnp.tanh(y)
    elif activation == "sigmoid":
        y = jax.nn.sigmoid(y)
    return y


if __name__ == "__main__":
    key = jax.random.PRNGKey(0)
    B, D_in, D_out = 16, 32, 128  # small, but D_out lane-dense (128 lanes)
    activation = "gelu"

    k1, k2, k3, k4, k5 = jax.random.split(key, 5)
    x = jax.random.normal(k1, (B, D_in), dtype=jnp.float32)
    w1 = jax.random.normal(k2, (D_in, D_out), dtype=jnp.float32) / math.sqrt(D_in)
    b1 = 0.1 * jax.random.normal(k3, (D_out,), dtype=jnp.float32)
    gamma = 1.0 + 0.1 * jax.random.normal(k4, (D_out,), dtype=jnp.float32)
    beta = 0.1 * jax.random.normal(k5, (D_out,), dtype=jnp.float32)

    out = mlp_block(x, w1, b1, gamma, beta, activation=activation)
    out = jax.block_until_ready(out)

    ref = _reference_mlp_block(x, w1, b1, gamma, beta, activation)
    assert out.shape == (B, D_out)
    err = jnp.max(jnp.abs(out.astype(jnp.float32) - ref))
    assert err < 2e-4, f"mismatch vs reference MLPBlock: {err}"

    print("KERNEL_OK")
</pallas_src>

<mosaic_0001>
module attributes {stable_mosaic.version = 11 : i64} {
  func.func @_mlp_block_kernel(%arg0: i32, %arg1: i32, %arg2: memref<8x32xf32, #tpu.memory_space<vmem>>, %arg3: memref<32x128xf32, #tpu.memory_space<vmem>>, %arg4: memref<1x128xf32, #tpu.memory_space<vmem>>, %arg5: memref<1x128xf32, #tpu.memory_space<vmem>>, %arg6: memref<1x128xf32, #tpu.memory_space<vmem>>, %arg7: memref<8x128xf32, #tpu.memory_space<vmem>>, %arg8: memref<8x128xf32, #tpu.memory_space<vmem>>) attributes {dimension_semantics = [#tpu.dimension_semantics<parallel>, #tpu.dimension_semantics<arbitrary>], iteration_bounds = array<i64: 2, 1>, scalar_prefetch = 0 : i64, scratch_operands = 1 : i64, tpu.core_type = #tpu.core_type<tc>, window_params = [{transform_indices = @transform_0, window_bounds = array<i64: 8, 32>}, {transform_indices = @transform_1, window_bounds = array<i64: 32, 128>}, {pipeline_mode = #tpu.pipeline_mode<synchronous>, transform_indices = @transform_2, window_bounds = array<i64: 1, 128>}, {pipeline_mode = #tpu.pipeline_mode<synchronous>, transform_indices = @transform_3, window_bounds = array<i64: 1, 128>}, {pipeline_mode = #tpu.pipeline_mode<synchronous>, transform_indices = @transform_4, window_bounds = array<i64: 1, 128>}, {transform_indices = @transform_5, window_bounds = array<i64: 8, 128>}]} {
    %c0_i32 = arith.constant 0 : i32
    %0 = arith.cmpi eq, %arg1, %c0_i32 : i32
    %1 = arith.extui %0 : i1 to i32
    %c0_i32_0 = arith.constant 0 : i32
    %2 = arith.cmpi ne, %1, %c0_i32_0 : i32
    scf.if %2 {
      %cst_10 = arith.constant 0.000000e+00 : f32
      %12 = vector.broadcast %cst_10 : f32 to vector<8x128xf32>
      %c0_11 = arith.constant 0 : index
      %c0_12 = arith.constant 0 : index
      %13 = vector.load %arg8[%c0_11, %c0_12] : memref<8x128xf32, #tpu.memory_space<vmem>>, vector<8x128xf32>
      tpu.vector_store %arg8[%c0_11, %c0_12], %12 {strides = array<i32>} : memref<8x128xf32, #tpu.memory_space<vmem>>, vector<8x128xf32>,
    } else {
    }
    %c0 = arith.constant 0 : index
    %c0_1 = arith.constant 0 : index
    %3 = vector.load %arg8[%c0, %c0_1] : memref<8x128xf32, #tpu.memory_space<vmem>>, vector<8x128xf32>
    %c0_2 = arith.constant 0 : index
    %c0_3 = arith.constant 0 : index
    %4 = vector.load %arg2[%c0_2, %c0_3] : memref<8x32xf32, #tpu.memory_space<vmem>>, vector<8x32xf32>
    %c0_4 = arith.constant 0 : index
    %c0_5 = arith.constant 0 : index
    %5 = vector.load %arg3[%c0_4, %c0_5] : memref<32x128xf32, #tpu.memory_space<vmem>>, vector<32x128xf32>
    %cst = arith.constant dense<0.000000e+00> : vector<8x128xf32>
    %6 = tpu.matmul %4, %5, %cst {dimension_numbers = #tpu.dot_dimension_numbers<[1], [0], [0], [1], [0, 0, 1, 1], [], []>} : vector<8x32xf32>, vector<32x128xf32>, vector<8x128xf32> -> vector<8x128xf32>
    %7 = arith.addf %3, %6 : vector<8x128xf32>
    %c0_6 = arith.constant 0 : index
    %c0_7 = arith.constant 0 : index
    %8 = vector.load %arg8[%c0_6, %c0_7] : memref<8x128xf32, #tpu.memory_space<vmem>>, vector<8x128xf32>
    tpu.vector_store %arg8[%c0_6, %c0_7], %7 {strides = array<i32>} : memref<8x128xf32, #tpu.memory_space<vmem>>, vector<8x128xf32>,
    %c0_i32_8 = arith.constant 0 : i32
    %9 = arith.cmpi eq, %arg1, %c0_i32_8 : i32
    %10 = arith.extui %9 : i1 to i32
    %c0_i32_9 = arith.constant 0 : i32
    %11 = arith.cmpi ne, %10, %c0_i32_9 : i32
    scf.if %11 {
      %c0_10 = arith.constant 0 : index
      %c0_11 = arith.constant 0 : index
      %12 = vector.load %arg8[%c0_10, %c0_11] : memref<8x128xf32, #tpu.memory_space<vmem>>, vector<8x128xf32>
      %c0_12 = arith.constant 0 : index
      %c0_13 = arith.constant 0 : index
      %13 = vector.load %arg4[%c0_12, %c0_13] : memref<1x128xf32, #tpu.memory_space<vmem>>, vector<1x128xf32>
      %14 = vector.broadcast %13 : vector<1x128xf32> to vector<8x128xf32>
      %15 = arith.addf %12, %14 : vector<8x128xf32>
      %cst_14 = arith.constant dense<0.000000e+00> : vector<8xf32>
      %16 = vector.multi_reduction <add>, %15, %cst_14 [1] : vector<8x128xf32> to vector<8xf32>
      %17 = vector.shape_cast %16 : vector<8xf32> to vector<8x1xf32>
      %18 = arith.mulf %15, %15 : vector<8x128xf32>
      %cst_15 = arith.constant dense<0.000000e+00> : vector<8xf32>
      %19 = vector.multi_reduction <add>, %18, %cst_15 [1] : vector<8x128xf32> to vector<8xf32>
      %20 = vector.shape_cast %19 : vector<8xf32> to vector<8x1xf32>
      %cst_16 = arith.constant 7.812500e-03 : f32
      %21 = vector.broadcast %cst_16 : f32 to vector<8x1xf32>
      %22 = arith.mulf %17, %21 : vector<8x1xf32>
      %cst_17 = arith.constant 7.812500e-03 : f32
      %23 = vector.broadcast %cst_17 : f32 to vector<8x1xf32>
      %24 = arith.mulf %20, %23 : vector<8x1xf32>
      %25 = arith.mulf %22, %22 : vector<8x1xf32>
      %26 = arith.subf %24, %25 : vector<8x1xf32>
      %cst_18 = arith.constant 0.000000e+00 : f32
      %27 = vector.broadcast %cst_18 : f32 to vector<8x1xf32>
      %28 = arith.maximumf %26, %27 : vector<8x1xf32>
      %cst_19 = arith.constant 9.99999974E-6 : f32
      %29 = vector.broadcast %cst_19 : f32 to vector<8x1xf32>
      %30 = arith.addf %28, %29 : vector<8x1xf32>
      %31 = math.rsqrt %30 : vector<8x1xf32>
      %32 = vector.broadcast %22 : vector<8x1xf32> to vector<8x128xf32>
      %33 = arith.subf %15, %32 : vector<8x128xf32>
      %34 = vector.broadcast %31 : vector<8x1xf32> to vector<8x128xf32>
      %35 = arith.mulf %33, %34 : vector<8x128xf32>
      %c0_20 = arith.constant 0 : index
      %c0_21 = arith.constant 0 : index
      %36 = vector.load %arg5[%c0_20, %c0_21] : memref<1x128xf32, #tpu.memory_space<vmem>>, vector<1x128xf32>
      %37 = vector.broadcast %36 : vector<1x128xf32> to vector<8x128xf32>
      %38 = arith.mulf %35, %37 : vector<8x128xf32>
      %c0_22 = arith.constant 0 : index
      %c0_23 = arith.constant 0 : index
      %39 = vector.load %arg6[%c0_22, %c0_23] : memref<1x128xf32, #tpu.memory_space<vmem>>, vector<1x128xf32>
      %40 = vector.broadcast %39 : vector<1x128xf32> to vector<8x128xf32>
      %41 = arith.addf %38, %40 : vector<8x128xf32>
      %42 = arith.mulf %41, %41 : vector<8x128xf32>
      %43 = arith.mulf %41, %42 : vector<8x128xf32>
      %cst_24 = arith.constant 4.471500e-02 : f32
      %44 = vector.broadcast %cst_24 : f32 to vector<8x128xf32>
      %45 = arith.mulf %44, %43 : vector<8x128xf32>
      %46 = arith.addf %41, %45 : vector<8x128xf32>
      %cst_25 = arith.constant 0.797884583 : f32
      %47 = vector.broadcast %cst_25 : f32 to vector<8x128xf32>
      %48 = arith.mulf %47, %46 : vector<8x128xf32>
      %49 = math.tanh %48 : vector<8x128xf32>
      %cst_26 = arith.constant 1.000000e+00 : f32
      %50 = vector.broadcast %cst_26 : f32 to vector<8x128xf32>
      %51 = arith.addf %50, %49 : vector<8x128xf32>
      %cst_27 = arith.constant 5.000000e-01 : f32
      %52 = vector.broadcast %cst_27 : f32 to vector<8x128xf32>
      %53 = arith.mulf %52, %51 : vector<8x128xf32>
      %54 = arith.mulf %41, %53 : vector<8x128xf32>
      %c0_28 = arith.constant 0 : index
      %c0_29 = arith.constant 0 : index
      %55 = vector.load %arg7[%c0_28, %c0_29] : memref<8x128xf32, #tpu.memory_space<vmem>>, vector<8x128xf32>
      tpu.vector_store %arg7[%c0_28, %c0_29], %54 {strides = array<i32>} : memref<8x128xf32, #tpu.memory_space<vmem>>, vector<8x128xf32>,
    } else {
    }
    return
  }
  func.func @transform_0(%arg0: i32, %arg1: i32) -> (i32, i32) {
    %c0_i32 = arith.constant 0 : i32
    return %arg0, %arg1 : i32, i32
  }
  func.func @transform_1(%arg0: i32, %arg1: i32) -> (i32, i32) {
    %c0_i32 = arith.constant 0 : i32
    %c0_i32_0 = arith.constant 0 : i32
    return %arg1, %c0_i32 : i32, i32
  }
  func.func @transform_2(%arg0: i32, %arg1: i32) -> (i32, i32) {
    %c0_i32 = arith.constant 0 : i32
    %c0_i32_0 = arith.constant 0 : i32
    %c0_i32_1 = arith.constant 0 : i32
    return %c0_i32, %c0_i32_0 : i32, i32
  }
  func.func @transform_3(%arg0: i32, %arg1: i32) -> (i32, i32) {
    %c0_i32 = arith.constant 0 : i32
    %c0_i32_0 = arith.constant 0 : i32
    %c0_i32_1 = arith.constant 0 : i32
    return %c0_i32, %c0_i32_0 : i32, i32
  }
  func.func @transform_4(%arg0: i32, %arg1: i32) -> (i32, i32) {
    %c0_i32 = arith.constant 0 : i32
    %c0_i32_0 = arith.constant 0 : i32
    %c0_i32_1 = arith.constant 0 : i32
    return %c0_i32, %c0_i32_0 : i32, i32
  }
  func.func @transform_5(%arg0: i32, %arg1: i32) -> (i32, i32) {
    %c0_i32 = arith.constant 0 : i32
    %c0_i32_0 = arith.constant 0 : i32
    return %arg0, %c0_i32 : i32, i32
  }
}

</mosaic_0001>

<llo_original>
// kernel: tpu_custom_call.1
$region0: #{tpu_custom_call.1}
  #allocation0 [shape = 'u32[]', space=smem, size = 0x4, offset = 0x4, fixed_abs, tag = 'smem constant byte address 0x4 - core index']
  #allocation1 [shape = 'u32[144,128]{1,0:T(1,128)}', space=vmem, size = 0x12000, scoped, tag = 'internal scratch']
  #allocation2 [shape = 'f32[8,128]{1,0:T(8,128)}', space=vmem, size = 0x1000, scoped, tag = 'scratch operand']
  %s0 = inlined_call_operand.hbm [shape: f32[16,32], index: 0, kind: input, shape index: {}]
  %s1 = inlined_call_operand.hbm [shape: f32[32,128], index: 1, kind: input, shape index: {}]
  %s2 = inlined_call_operand.vmem [shape: f32[1,128], index: 2, kind: input, shape index: {}]
  %s3 = inlined_call_operand.vmem [shape: f32[1,128], index: 3, kind: input, shape index: {}]
  %s4 = inlined_call_operand.vmem [shape: f32[1,128], index: 4, kind: input, shape index: {}]
  %s5 = inlined_call_operand.hbm [shape: f32[16,128], index: 5, kind: output, shape index: {}]
  %s6 = sld [smem:[#allocation0]]
  $region69: #{tpu_custom_call.1} parent=0
    _
  %s8 = ssub.s32 1, %s6
  %s9 = scalar_select 0, %s8, %s6
  $region1: #{tpu_custom_call.1} parent=0
    #allocation3 [shape = 'u8[8192]{0}', space=vmem, size = 0x2000, scoped, tag = 'input window, operand 0']
    #allocation4 [shape = 's32[2]{0}', space=sflag, size = 0x8, scoped, tag = 'scoped memory for tpu_custom_call.1']
    #allocation5 [shape = 's32[2]{0}', space=sflag, size = 0x8, scoped, tag = 'scoped memory for tpu_custom_call.1']
    #allocation6 [shape = 'u8[16384]{0}', space=vmem, size = 0x4000, scoped, tag = 'input window, operand 1, single buffered']
    #allocation7 [shape = 's32[1]{0}', space=sflag, size = 0x4, scoped, tag = 'scoped memory for tpu_custom_call.1']
    #allocation8 [shape = 'u8[8192]{0}', space=vmem, size = 0x2000, scoped, tag = 'output window, operand 0']
    %10 = vsyncpa [#allocation4], 0
    %s11 = scalar_lea.sflag [#allocation4], 1
    %12 = vsyncpa %s11, 0
    %13 = vsyncpa [#allocation7], 0
    %14 = vsyncpa [#allocation5], 0
    %s15 = scalar_lea.sflag [#allocation5], 1
    %16 = vsyncpa %s15, 0
    loop: start=0, step=1, limit=4
    $region2: #{tpu_custom_call.1} parent=1 // loop_pre_header
      _
    $region3: #{tpu_custom_call.1} parent=1 // loop_header
      %s18 = sphi 0, %s22
      %p19 = scmp.ge.s32.totalorder %s18, 4
      %s25 = sphi 0, %s37
      %s26 = sphi 0, %s33
      %s27 = sphi 0, %s25
      %s28 = sphi 0, %s26
      %s29 = sphi 0, %s27
      %s30 = sphi 0, %s28
      %s42 = sphi 0, %s44
      %s45 = sphi 0, %s42
      %s46 = sphi 0, %s45
      %s62 = sphi 0, %s46
      %s68 = sphi 0, %s70
      %s71 = sphi 0, %s68
      %s72 = sphi 0, %s71
      %s88 = sphi 0, %s72
      %s92 = sphi 0, %s92
      %s94 = sphi 0, %s92
      %s95 = sphi 0, %s94
      %s109 = sphi 0, %s95
      %s113 = sphi 0, %s113
      %s115 = sphi 0, %s113
      %s116 = sphi 0, %s115
      %s130 = sphi 0, %s116
      %s134 = sphi 0, %s134
      %s136 = sphi 0, %s134
      %s137 = sphi 0, %s136
      %s151 = sphi 0, %s137
      %s157 = sphi 0, %s159
      %s160 = sphi 0, %s157
      %s161 = sphi 0, %s160
      %s177 = sphi 0, %s161
    $region4: #{tpu_custom_call.1} parent=1 // loop_header_branch
      %21 = sbr.rel (%p19) target = $region8
    $region5: #{tpu_custom_call.1} parent=1 // loop_body
      %s23 = ssub.s32 %s18, 1
      %s24 = ssub.s32 %s18, 2
      %s31 = sadd.s32 1, %s26
      %p32 = scmp.ge.s32.totalorder %s31, 1
      %s33 = scalar_select %p32, 0, %s31
      %s34 = sadd.s32 1, %s25
      %s35 = scalar_select %p32, %s34, %s25
      %p36 = scmp.ge.s32.totalorder %s35, 2
      %s37 = scalar_select %p36, 0, %s35
      %s38 = ssub.s32 %s25, %s37
      %s39 = ssub.s32 %s26, %s33
      %s40 = sor.u32 %s38, %s39
      %p41 = scmp.eq.s32.totalorder %s40, 0
      %s43 = sadd.s32 %s42, 1
      %s44 = scalar_select %p41, %s42, %s43
      %p47 = pneg %p41
      %p48 = scmp.eq.s32.totalorder %s18, 1
      %p49 = por %p47, %p48
      %p50 = scmp.ne.s32.totalorder %s42, %s45
      %p51 = scmp.eq.s32.totalorder %s18, 0
      %p52 = por %p50, %p51
      %p53 = scmp.ne.s32.totalorder %s42, %s45
      %p54 = scmp.eq.s32.totalorder %s23, 1
      %p55 = por %p53, %p54
      %p56 = scmp.ne.s32.totalorder %s45, %s46
      %p57 = scmp.eq.s32.totalorder %s23, 0
      %p58 = por %p56, %p57
      %p59 = scmp.ne.s32.totalorder %s45, %s46
      %p60 = scmp.eq.s32.totalorder %s24, 1
      %p61 = por %p59, %p60
      %p63 = scmp.ne.s32.totalorder %s46, %s62
      %p64 = scmp.eq.s32.totalorder %s24, 0
      %p65 = por %p63, %p64
      %s66 = ssub.s32 %s26, %s33
      %p67 = scmp.eq.s32.totalorder %s66, 0
      %s69 = sadd.s32 %s68, 1
      %s70 = scalar_select %p67, %s68, %s69
      %p73 = pneg %p67
      %p74 = scmp.eq.s32.totalorder %s18, 1
      %p75 = por %p73, %p74
      %p76 = scmp.ne.s32.totalorder %s68, %s71
      %p77 = scmp.eq.s32.totalorder %s18, 0
      %p78 = por %p76, %p77
      %p79 = scmp.ne.s32.totalorder %s68, %s71
      %p80 = scmp.eq.s32.totalorder %s23, 1
      %p81 = por %p79, %p80
      %p82 = scmp.ne.s32.totalorder %s71, %s72
      %p83 = scmp.eq.s32.totalorder %s23, 0
      %p84 = por %p82, %p83
      %p85 = scmp.ne.s32.totalorder %s71, %s72
      %p86 = scmp.eq.s32.totalorder %s24, 1
      %p87 = por %p85, %p86
      %p89 = scmp.ne.s32.totalorder %s72, %s88
      %p90 = scmp.eq.s32.totalorder %s24, 0
      %p91 = por %p89, %p90
      %s93 = sadd.s32 %s92, 1
      %p96 = scmp.eq.s32.totalorder %s18, 1
      %p97 = scmp.ne.s32.totalorder %s92, %s94
      %p98 = scmp.eq.s32.totalorder %s18, 0
      %p99 = por %p97, %p98
      %p100 = scmp.ne.s32.totalorder %s92, %s94
      %p101 = scmp.eq.s32.totalorder %s23, 1
      %p102 = por %p100, %p101
      %p103 = scmp.ne.s32.totalorder %s94, %s95
      %p104 = scmp.eq.s32.totalorder %s23, 0
      %p105 = por %p103, %p104
      %p106 = scmp.ne.s32.totalorder %s94, %s95
      %p107 = scmp.eq.s32.totalorder %s24, 1
      %p108 = por %p106, %p107
      %p110 = scmp.ne.s32.totalorder %s95, %s109
      %p111 = scmp.eq.s32.totalorder %s24, 0
      %p112 = por %p110, %p111
      %s114 = sadd.s32 %s113, 1
      %p117 = scmp.eq.s32.totalorder %s18, 1
      %p118 = scmp.ne.s32.totalorder %s113, %s115
      %p119 = scmp.eq.s32.totalorder %s18, 0
      %p120 = por %p118, %p119
      %p121 = scmp.ne.s32.totalorder %s113, %s115
      %p122 = scmp.eq.s32.totalorder %s23, 1
      %p123 = por %p121, %p122
      %p124 = scmp.ne.s32.totalorder %s115, %s116
      %p125 = scmp.eq.s32.totalorder %s23, 0
      %p126 = por %p124, %p125
      %p127 = scmp.ne.s32.totalorder %s115, %s116
      %p128 = scmp.eq.s32.totalorder %s24, 1
      %p129 = por %p127, %p128
      %p131 = scmp.ne.s32.totalorder %s116, %s130
      %p132 = scmp.eq.s32.totalorder %s24, 0
      %p133 = por %p131, %p132
      %s135 = sadd.s32 %s134, 1
      %p138 = scmp.eq.s32.totalorder %s18, 1
      %p139 = scmp.ne.s32.totalorder %s134, %s136
      %p140 = scmp.eq.s32.totalorder %s18, 0
      %p141 = por %p139, %p140
      %p142 = scmp.ne.s32.totalorder %s134, %s136
      %p143 = scmp.eq.s32.totalorder %s23, 1
      %p144 = por %p142, %p143
      %p145 = scmp.ne.s32.totalorder %s136, %s137
      %p146 = scmp.eq.s32.totalorder %s23, 0
      %p147 = por %p145, %p146
      %p148 = scmp.ne.s32.totalorder %s136, %s137
      %p149 = scmp.eq.s32.totalorder %s24, 1
      %p150 = por %p148, %p149
      %p152 = scmp.ne.s32.totalorder %s137, %s151
      %p153 = scmp.eq.s32.totalorder %s24, 0
      %p154 = por %p152, %p153
      %s155 = ssub.s32 %s25, %s37
      %p156 = scmp.eq.s32.totalorder %s155, 0
      %s158 = sadd.s32 %s157, 1
      %s159 = scalar_select %p156, %s157, %s158
      %p162 = pneg %p156
      %p163 = scmp.eq.s32.totalorder %s18, 1
      %p164 = por %p162, %p163
      %p165 = scmp.ne.s32.totalorder %s157, %s160
      %p166 = scmp.eq.s32.totalorder %s18, 0
      %p167 = por %p165, %p166
      %p168 = scmp.ne.s32.totalorder %s157, %s160
      %p169 = scmp.eq.s32.totalorder %s23, 1
      %p170 = por %p168, %p169
      %p171 = scmp.ne.s32.totalorder %s160, %s161
      %p172 = scmp.eq.s32.totalorder %s23, 0
      %p173 = por %p171, %p172
      %p174 = scmp.ne.s32.totalorder %s160, %s161
      %p175 = scmp.eq.s32.totalorder %s24, 1
      %p176 = por %p174, %p175
      %p178 = scmp.ne.s32.totalorder %s161, %s177
      %p179 = scmp.eq.s32.totalorder %s24, 0
      %p180 = por %p178, %p179
      %p181 = scmp.le.s32.totalorder 1, %s18
      %p182 = scmp.lt.s32.totalorder %s18, 3
      %p183 = pnand %p181, %p182
      %p184 = pneg %p183
      // Predicated region
      $region9: #{tpu_custom_call.1} parent=5 // pred_check
        _
      $region10: #{tpu_custom_call.1} parent=5 // pred_check_branch
        %186 = sbr.rel (%p183) target = $region12
      $region11: #{tpu_custom_call.1} parent=5 // pred_region
        %s187 = ssub.s32 %s18, 1
        // Predicated region
        $region13: #{tpu_custom_call.1} parent=11 // pred_check
          %p188 = pneg %p84
        $region14: #{tpu_custom_call.1} parent=11 // pred_check_branch
          %190 = sbr.rel (%p188) target = $region16
        $region15: #{tpu_custom_call.1} parent=11 // pred_region
          %s191 = smul.u32 4, %s28
          %s193 = ssub.s32 512, 512
          %194 = vsyncadd [#allocation7], %s193
          %s195 = smul.addr %s191, 128
          %s196 = scalar_lea.hbm %s1, %s195
          %s197 = sshll.u32 [#allocation6], 4
          %s198 = int_to_ptr.vmem [resolvable:$true] %s197
          %203 = dma.hbm_to_vmem [thread:$0]  %s196, 512, %s198, [#allocation7], 128, 128, 8
        $region16: #{tpu_custom_call.1} parent=11 // pred_fallthru
          _
        // Predicated region
        $region17: #{tpu_custom_call.1} parent=11 // pred_check
          %p204 = pneg %p105
        $region18: #{tpu_custom_call.1} parent=11 // pred_check_branch
          %206 = sbr.rel (%p204) target = $region20
        $region19: #{tpu_custom_call.1} parent=11 // pred_region
          _
        $region20: #{tpu_custom_call.1} parent=11 // pred_fallthru
          _
        // Predicated region
        $region21: #{tpu_custom_call.1} parent=11 // pred_check
          %p207 = pneg %p126
        $region22: #{tpu_custom_call.1} parent=11 // pred_check_branch
          %209 = sbr.rel (%p207) target = $region24
        $region23: #{tpu_custom_call.1} parent=11 // pred_region
          _
        $region24: #{tpu_custom_call.1} parent=11 // pred_fallthru
          _
        // Predicated region
        $region25: #{tpu_custom_call.1} parent=11 // pred_check
          %p210 = pneg %p147
        $region26: #{tpu_custom_call.1} parent=11 // pred_check_branch
          %212 = sbr.rel (%p210) target = $region28
        $region27: #{tpu_custom_call.1} parent=11 // pred_region
          _
        $region28: #{tpu_custom_call.1} parent=11 // pred_fallthru
          _
      $region12: #{tpu_custom_call.1} parent=5 // pred_fallthru
        _
      %p213 = scmp.lt.s32.totalorder %s18, 2
      // Predicated region
      $region29: #{tpu_custom_call.1} parent=5 // pred_check
        %p214 = pneg %p213
      $region30: #{tpu_custom_call.1} parent=5 // pred_check_branch
        %216 = sbr.rel (%p214) target = $region32
      $region31: #{tpu_custom_call.1} parent=5 // pred_region
        // Predicated region
        $region33: #{tpu_custom_call.1} parent=31 // pred_check
          %p217 = pneg %p52
        $region34: #{tpu_custom_call.1} parent=31 // pred_check_branch
          %219 = sbr.rel (%p217) target = $region36
        $region35: #{tpu_custom_call.1} parent=31 // pred_region
          %s220 = sand.u32 %s42, 1
          %s221 = scalar_lea.sflag [#allocation4], %s220
          %s222 = sand.u32 %s42, 1
          %s223 = smul.addr %s222, 8
          %s224 = scalar_lea.vmem [#allocation3], %s223
          %s226 = ssub.s32 128, 128
          %227 = vsyncadd %s221, %s226
          %s228 = sadd.s32 %s26, %s25
          %s229 = smul.addr %s228, 128
          %s230 = scalar_lea.hbm %s0, %s229
          %s232 = sshll.u32 %s224, 4
          %s233 = int_to_ptr.vmem [resolvable:$true] %s232
          %235 = dma.hbm_to_vmem [thread:$0]  %s230, 128, %s233, %s221
        $region36: #{tpu_custom_call.1} parent=31 // pred_fallthru
          _
      $region32: #{tpu_custom_call.1} parent=5 // pred_fallthru
        _
      %p236 = scmp.le.s32.totalorder 1, %s18
      %p237 = scmp.lt.s32.totalorder %s18, 3
      %p238 = pnand %p236, %p237
      %p239 = pneg %p238
      // Predicated region
      $region37: #{tpu_custom_call.1} parent=5 // pred_check
        _
      $region38: #{tpu_custom_call.1} parent=5 // pred_check_branch
        %241 = sbr.rel (%p238) target = $region40
      $region39: #{tpu_custom_call.1} parent=5 // pred_region
        %s242 = ssub.s32 %s18, 1
        %s243 = sand.u32 %s45, 1
        %s244 = scalar_lea.sflag [#allocation4], %s243
        %s245 = sand.u32 %s45, 1
        %s246 = smul.addr %s245, 8
        %s247 = scalar_lea.vmem [#allocation3], %s246
        // Predicated region
        $region41: #{tpu_custom_call.1} parent=39 // pred_check
          %p248 = pneg %p58
        $region42: #{tpu_custom_call.1} parent=39 // pred_check_branch
          %250 = sbr.rel (%p248) target = $region44
        $region43: #{tpu_custom_call.1} parent=39 // pred_region
          %251 = dma.done %s244, 128
        $region44: #{tpu_custom_call.1} parent=39 // pred_fallthru
          _
        // Predicated region
        $region45: #{tpu_custom_call.1} parent=39 // pred_check
          %p252 = pneg %p84
        $region46: #{tpu_custom_call.1} parent=39 // pred_check_branch
          %254 = sbr.rel (%p252) target = $region48
        $region47: #{tpu_custom_call.1} parent=39 // pred_region
          %255 = dma.done [#allocation7], 512
        $region48: #{tpu_custom_call.1} parent=39 // pred_fallthru
          _
        %s256 = sand.u32 %s45, 1
        %s257 = scalar_lea.sflag [#allocation4], %s256
        %s258 = sand.u32 %s45, 1
        %s259 = smul.addr %s258, 8
        %s260 = scalar_lea.vmem [#allocation3], %s259
        %p261 = pneg %p58
        %p262 = pneg %p55
        %p263 = pneg %p84
        %p264 = pneg %p81
        %p265 = pneg %p105
        %p266 = pneg %p102
        %p267 = pneg %p126
        %p268 = pneg %p123
        %p269 = pneg %p147
        %p270 = pneg %p144
        %p271 = pneg %p173
        %p272 = pneg %p170
        %s273 = sand.u32 %s160, 1
        %s274 = scalar_lea.sflag [#allocation5], %s273
        %s275 = sand.u32 %s160, 1
        %s276 = smul.addr %s275, 8
        %s277 = scalar_lea.vmem [#allocation8], %s276
        %s278 = smul.u32 4, %s28
        %p279 = scmp.eq.s32.totalorder %s28, 0
        // Predicated region
        $region49: #{tpu_custom_call.1} parent=39 // pred_check
          %p280 = pneg %p279
        $region50: #{tpu_custom_call.1} parent=39 // pred_check_branch
          %282 = sbr.rel (%p280) target = $region52
        $region51: #{tpu_custom_call.1} parent=39 // pred_region
          %283 = vst [vmem:[#allocation2] sm:$0xff] 0.0
        $region52: #{tpu_custom_call.1} parent=39 // pred_fallthru
          _
        %v284 = vld [vmem:[#allocation2] sm:$0xff]
        %v285 = vld [vmem:[%s247] sm:$0xff]
        %v286 = vld [vmem:[#allocation6] sm:$0xff]
        %v287 = vld [vmem:[#allocation6 + $0x8] sm:$0xff]
        %v288 = vld [vmem:[#allocation6 + $0x10] sm:$0xff]
        %v289 = vld [vmem:[#allocation6 + $0x18] sm:$0xff]
        %vm290 = vcmask 261120
        %v292 = vsel %vm290, %v285, 0
        %294 = vmatprep.subr.mxu0 0.0
        %295 = vmatpush1.msra.mxu0 %v286
        %296 = vmatprep.subr.mxu0 0.0
        %297 = vmatpush1.msra.mxu0 %v287
        %298 = vmatprep.subr.mxu0 0.0
        %299 = vmatpush1.msra.mxu0 %v288
        %300 = vmatprep.subr.mxu0 0.0
        %301 = vmatpush1.msra.mxu0 %v289
        %302 = vmatprep.subr.mxu0 0.0
        %303 = vmatpush1.msra.mxu0 0.0
        %304 = vmatprep.subr.mxu0 0.0
        %305 = vmatpush1.msra.mxu0 0.0
        %306 = vmatprep.subr.mxu0 0.0
        %307 = vmatpush1.msra.mxu0 0.0
        %308 = vmatprep.subr.mxu0 0.0
        %309 = vmatpush1.msra.mxu0 0.0
        %310 = vmatprep.subr.mxu0 0.0
        %311 = vmatpush1.msra.mxu0 0.0
        %312 = vmatprep.subr.mxu0 0.0
        %313 = vmatpush1.msra.mxu0 0.0
        %314 = vmatprep.subr.mxu0 0.0
        %315 = vmatpush1.msra.mxu0 0.0
        %316 = vmatprep.subr.mxu0 0.0
        %317 = vmatpush1.msra.mxu0 0.0
        %318 = vmatprep.subr.mxu0 0.0
        %319 = vmatpush1.msra.mxu0 0.0
        %320 = vmatprep.subr.mxu0 0.0
        %321 = vmatpush1.msra.mxu0 0.0
        %322 = vmatprep.subr.mxu0 0.0
        %323 = vmatpush1.msra.mxu0 0.0
        %324 = vmatprep.subr.mxu0 0.0
        %325 = vmatpush1.msra.mxu0 0.0
        %326 = vmatprep.subr.mxu0 0.0
        %327 = vmatpush1.msra.mxu0 0.0
        %328 = vmatprep.subr.mxu0 0.0
        %329 = vmatpush1.msra.mxu0 0.0
        %330 = vmatprep.subr.mxu0 0.0
        %331 = vmatpush1.msra.mxu0 0.0
        %332 = vmatprep.subr.mxu0 0.0
        %333 = vmatpush1.msra.mxu0 0.0
        %334 = vmatprep.subr.mxu0 0.0
        %335 = vmatpush1.msra.mxu0 0.0
        %336 = vmatprep.subr.mxu0 0.0
        %337 = vmatpush1.msra.mxu0 0.0
        %338 = vmatprep.subr.mxu0 0.0
        %339 = vmatpush1.msra.mxu0 0.0
        %340 = vmatprep.subr.mxu0 0.0
        %341 = vmatpush1.msra.mxu0 0.0
        %342 = vmatprep.subr.mxu0 0.0
        %343 = vmatpush1.msra.mxu0 0.0
        %344 = vmatprep.subr.mxu0 0.0
        %345 = vmatpush1.msra.mxu0 0.0
        %346 = vmatprep.subr.mxu0 0.0
        %347 = vmatpush1.msra.mxu0 0.0
        %348 = vmatprep.subr.mxu0 0.0
        %349 = vmatpush1.msra.mxu0 0.0
        %350 = vmatprep.subr.mxu0 0.0
        %351 = vmatpush1.msra.mxu0 0.0
        %352 = vmatprep.subr.mxu0 0.0
        %353 = vmatpush1.msra.mxu0 0.0
        %354 = vmatprep.subr.mxu0 0.0
        %355 = vmatpush1.msra.mxu0 0.0
        %356 = vmatprep.subr.mxu0 0.0
        %357 = vmatpush1.msra.mxu0 0.0
        %358 = vmatprep.mubr.f32.mxu0 0.0
        %359 = vmatmul.mubr.f32.gmra.mrb[0].mxu0 %v292
        %v360 = vpop.f32.mrb[0].mxu0
        %v361 = vadd.f32 0.0, %v360
        %v362 = vpop.f32.mrb[0].mxu0
        %363 = vdwg.mxu0
        %v364 = vadd.f32 %v284, %v361
        %365 = vst [vmem:[#allocation2] sm:$0xff] %v364
        // Predicated region
        $region53: #{tpu_custom_call.1} parent=39 // pred_check
          %p366 = pneg %p279
        $region54: #{tpu_custom_call.1} parent=39 // pred_check_branch
          %368 = sbr.rel (%p366) target = $region56
        $region55: #{tpu_custom_call.1} parent=39 // pred_region
          %v369 = vld [vmem:[#allocation2] sm:$0xff]
          %v370 = vld [vmem:[%s2] sm:$0x1]
          %v372 = vlaneseq
          %v373 = vshrl.u32 %v372, 7
          %v374 = vsub.s32 0, %v373
          %v375 = vrot.slane %v370, %v374
          %v377 = vadd.f32 %v369, %v375
          %378 = vadd.xlane.f32.xlu0 %v377
          %v379 = vpop.xlane.xlu0 %378
          %v380 = vmul.f32 %v377, %v377
          %381 = vadd.xlane.f32.xlu0 %v380
          %v382 = vpop.xlane.xlu0 %381
          %v383 = vmul.f32 %v379, 0.0078125
          %v384 = vmul.f32 %v382, 0.0078125
          %v385 = vmul.f32 %v383, %v383
          %v386 = vsub.f32 %v384, %v385
          %v387 = vmax.f32 %v386, 0.0
          %v388 = vadd.f32 %v387, 1e-05
          %v389 = vrsqrt.pop %v388
          %v390 = vsub.f32 %v377, %v383
          %v391 = vmul.f32 %v390, %v389
          %v392 = vld [vmem:[%s3] sm:$0x1]
          %v394 = vlaneseq
          %v395 = vshrl.u32 %v394, 7
          %v396 = vsub.s32 0, %v395
          %v397 = vrot.slane %v392, %v396
          %v399 = vmul.f32 %v391, %v397
          %v400 = vld [vmem:[%s4] sm:$0x1]
          %v402 = vlaneseq
          %v403 = vshrl.u32 %v402, 7
          %v404 = vsub.s32 0, %v403
          %v405 = vrot.slane %v400, %v404
          %v407 = vadd.f32 %v399, %v405
          %v408 = vmul.f32 %v407, %v407
          %v409 = vmul.f32 %v407, %v408
          %v410 = vmul.f32 %v409, 0.044715
          %v411 = vadd.f32 %v407, %v410
          %v412 = vmul.f32 %v411, 0.7978846
          %v413 = vtanh.pop %v412
          %v414 = vadd.f32 %v413, 1.0
          %v415 = vmul.f32 %v414, 0.5
          %v416 = vmul.f32 %v407, %v415
          %417 = vst [vmem:[%s277] sm:$0xff] %v416
        $region56: #{tpu_custom_call.1} parent=39 // pred_fallthru
          _
        %s418 = sand.u32 %s160, 1
        %s419 = scalar_lea.sflag [#allocation5], %s418
        %s420 = sand.u32 %s160, 1
        %s421 = smul.addr %s420, 8
        %s422 = scalar_lea.vmem [#allocation8], %s421
        // Predicated region
        $region57: #{tpu_custom_call.1} parent=39 // pred_check
          %p423 = pneg %p170
        $region58: #{tpu_custom_call.1} parent=39 // pred_check_branch
          %425 = sbr.rel (%p423) target = $region60
        $region59: #{tpu_custom_call.1} parent=39 // pred_region
          %s427 = ssub.s32 128, 128
          %428 = vsyncadd %s419, %s427
          %s429 = smul.addr %s27, 128
          %s430 = scalar_lea.hbm %s5, %s429
          %s432 = sshll.u32 %s422, 4
          %s433 = int_to_ptr.vmem [resolvable:$true] %s432
          %435 = dma.vmem_to_hbm [thread:$0]  %s433, 128, %s430, %s419
        $region60: #{tpu_custom_call.1} parent=39 // pred_fallthru
          _
      $region40: #{tpu_custom_call.1} parent=5 // pred_fallthru
        _
      %p436 = scmp.le.s32.totalorder 2, %s18
      // Predicated region
      $region61: #{tpu_custom_call.1} parent=5 // pred_check
        %p437 = pneg %p436
      $region62: #{tpu_custom_call.1} parent=5 // pred_check_branch
        %439 = sbr.rel (%p437) target = $region64
      $region63: #{tpu_custom_call.1} parent=5 // pred_region
        %s440 = ssub.s32 %s18, 2
        // Predicated region
        $region65: #{tpu_custom_call.1} parent=63 // pred_check
          %p441 = pneg %p176
        $region66: #{tpu_custom_call.1} parent=63 // pred_check_branch
          %443 = sbr.rel (%p441) target = $region68
        $region67: #{tpu_custom_call.1} parent=63 // pred_region
          %s444 = sand.u32 %s161, 1
          %s445 = scalar_lea.sflag [#allocation5], %s444
          %s446 = sand.u32 %s161, 1
          %s447 = smul.addr %s446, 8
          %s448 = scalar_lea.vmem [#allocation8], %s447
          %449 = dma.done %s445, 128
        $region68: #{tpu_custom_call.1} parent=63 // pred_fallthru
          _
      $region64: #{tpu_custom_call.1} parent=5 // pred_fallthru
        _
    $region6: #{tpu_custom_call.1} parent=1 // loop_footer
      %s22 = sadd.s32 1, %s18
    $region7: #{tpu_custom_call.1} parent=1 // loop_footer_branch
      %17 = sbr.rel target = $region3
    $region8: #{tpu_custom_call.1} parent=1 // loop_exit
      _
    %450 = vsyncpa [#allocation4], 1
    %s451 = scalar_lea.sflag [#allocation4], 1
    %452 = vsyncpa %s451, 1
    %453 = vsyncpa [#allocation7], 1
    %454 = vsyncpa [#allocation5], 1
    %s455 = scalar_lea.sflag [#allocation5], 1
    %456 = vsyncpa %s455, 1

</llo_original>
